<compile_context>
chip_gen: v6e
topology: v6e:2x2x1
jax: 0.10.0
libtpu: 0.0.40
codegen_flags: <defaults>
</compile_context>

<pallas_src>
import functools

import jax
import jax.numpy as jnp
from jax import lax
from jax.experimental import pallas as pl
from jax.experimental.pallas import tpu as pltpu

G = 9.81

IN_DIM = 5         # state size (x, y, u, v, lambda)
HID = 10           # hidden width
OUT_DIM = 4        # net output size (fills f[:-1])

DIM_PAD = 16       # padded feature rows (sublane axis; holds in=5, hid=10, out=4, f=5)
MIN_LANES = 128    # lane granularity
LANE_BLOCK = 2048  # batch lanes per grid step for very large batches


# ----------------------------------------------------------------------------
# Shared per-tile forward: y is a (16, T) f32 value, w is a (5, 16, 16) value.
# ----------------------------------------------------------------------------
def _forward_tile(y, w):
    cd = w.dtype  # compute dtype for the MLP (f32, or bf16 on v6e/v7x)

    # net(y): 4 hidden tanh layers + final linear, all bias-free.
    # (16,16) @ (16,T) MXU dots: N = batch tile (lane-dense).
    h = y.astype(cd)
    for k in range(4):
        h = jnp.tanh(
            jnp.dot(w[k], h, preferred_element_type=jnp.float32).astype(cd))
    # rows 0..3 = net output, rows 4..15 are exactly zero (padded weight rows)
    net_out = jnp.dot(w[4], h, preferred_element_type=jnp.float32)       # (16, T) f32

    # algebraic residual (kept in f32 from the original state tile):
    #   f[-1] = y4*(y0^2 + y1^2) + g*y1 - (y2^2 + y3^2)
    y0 = y[0:1, :]
    y1 = y[1:2, :]
    y2 = y[2:3, :]
    y3 = y[3:4, :]
    y4 = y[4:5, :]
    alg = y4 * (y0 * y0 + y1 * y1) + G * y1 - (y2 * y2 + y3 * y3)        # (1, T)

    # f = clone(y); f[:-1] = net(y); f[-1] = alg  -> single sublane-iota select
    row = lax.broadcasted_iota(jnp.int32, net_out.shape, 0)
    return jnp.where(row == OUT_DIM, alg, net_out)                        # (16, T) f32


def odefunc_kernel(y_ref, w_ref, f_ref):
    """One lane-block of states: y_ref (16, T), w_ref (5, 16, 16), f_ref (16, T)."""
    f_ref[...] = _forward_tile(y_ref[...], w_ref[...])


def rk4_fused_kernel(y_ref, w_ref, o_ref, *, dt, n_steps):
    """Fused integrator: n_steps RK4 steps (4 f-evals each) in ONE pallas_call.

    State tile and the ~5 KiB of weights stay resident in VMEM for the whole
    loop; no per-step launch or HBM round trip.
    """
    w = w_ref[...]

    def body(_, y):
        k1 = _forward_tile(y, w)
        k2 = _forward_tile(y + (0.5 * dt) * k1, w)
        k3 = _forward_tile(y + (0.5 * dt) * k2, w)
        k4 = _forward_tile(y + dt * k3, w)
        return y + (dt / 6.0) * (k1 + 2.0 * k2 + 2.0 * k3 + k4)

    o_ref[...] = lax.fori_loop(0, n_steps, body, y_ref[...])


# ----------------------------------------------------------------------------
# Parameter construction / packing (hoisted out of the per-step path).
# ----------------------------------------------------------------------------
def make_params(key):
    """nn.init.normal_(w, mean=0.001, std=0.01) for each bias-free Linear."""
    shapes = [(HID, IN_DIM), (HID, HID), (HID, HID), (HID, HID), (OUT_DIM, HID)]
    keys = jax.random.split(key, len(shapes))
    return [0.001 + 0.01 * jax.random.normal(k, s, dtype=jnp.float32)
            for k, s in zip(keys, shapes)]


def pack_weights(weights, dtype=jnp.float32):
    """Pack the five bias-free (out, in) weights into one (5, 16, 16) slab.

    Call ONCE (outside the ODE time loop) and reuse on every step.  Zero
    padding of rows/cols is exact only because the layers are bias-free and
    tanh(0) = 0 — asserted structurally here.
    """
    expected = [(HID, IN_DIM), (HID, HID), (HID, HID), (HID, HID), (OUT_DIM, HID)]
    assert len(weights) == 5, "expected 5 bias-free Linear weights"
    w_all = jnp.zeros((5, DIM_PAD, DIM_PAD), jnp.float32)
    for k, (w, shp) in enumerate(zip(weights, expected)):
        w = jnp.asarray(w, jnp.float32)
        assert w.shape == shp, f"layer {k}: expected bias-free weight {shp}, got {w.shape}"
        w_all = w_all.at[k, :shp[0], :shp[1]].set(w)
    return w_all.astype(dtype)


def pick_compute_dtype():
    """bf16 MLP on chips with bf16 VPU/EUP (v6e/v7x); f32 on v5e / unknown."""
    try:
        kind = jax.devices()[0].device_kind.lower()
    except Exception:
        return jnp.float32
    if "v6" in kind or "v7" in kind:
        return jnp.bfloat16
    return jnp.float32


# ----------------------------------------------------------------------------
# Wrappers.
# ----------------------------------------------------------------------------
def _round_up(n, m):
    return -(-n // m) * m


def _choose_tiling(batch):
    """Pick (lane tile, n_blocks) with >=2 blocks for large batches (v7x megacore)."""
    lanes = _round_up(max(batch, 1), MIN_LANES)
    if lanes <= MIN_LANES:
        return MIN_LANES, 1
    if lanes <= 2 * LANE_BLOCK:
        tile = _round_up(-(-lanes // 2), MIN_LANES)
        return tile, -(-lanes // tile)
    return LANE_BLOCK, -(-lanes // LANE_BLOCK)


def ode_func_batched(t, Y, w_all):
    """Batched forward: Y is (B, 5) states, returns (B, 5) f32. t is unused."""
    del t  # matches the PyTorch forward signature
    B = Y.shape[0]
    tile, n_blocks = _choose_tiling(B)
    b_pad = tile * n_blocks

    # Transposed, lane-dense layout: features on sublanes, batch on lanes.
    y_pad = jnp.zeros((DIM_PAD, b_pad), jnp.float32).at[:IN_DIM, :B].set(
        Y.astype(jnp.float32).T)
    out_shape = jax.ShapeDtypeStruct((DIM_PAD, b_pad), jnp.float32)

    if n_blocks == 1:
        # Single tile: no grid, no pipelining machinery, whole arrays in VMEM.
        f_pad = pl.pallas_call(odefunc_kernel, out_shape=out_shape)(y_pad, w_all)
    else:
        # Tile the batch (lane) dim; "parallel" lets v7x megacore split blocks
        # across its two TensorCores.  Weights use a constant index_map so the
        # (5,16,16) slab stays VMEM-resident across grid steps.
        f_pad = pl.pallas_call(
            odefunc_kernel,
            out_shape=out_shape,
            grid=(n_blocks,),
            in_specs=[pl.BlockSpec((DIM_PAD, tile), lambda i: (0, i)),
                      pl.BlockSpec((5, DIM_PAD, DIM_PAD), lambda i: (0, 0, 0))],
            out_specs=pl.BlockSpec((DIM_PAD, tile), lambda i: (0, i)),
            compiler_params=pltpu.CompilerParams(
                dimension_semantics=("parallel",)),
        )(y_pad, w_all)

    return f_pad[:IN_DIM, :B].T


def ode_func(t, y, w_all):
    """Single-state forward matching the PyTorch signature: y is (5,)."""
    return ode_func_batched(t, y[None, :], w_all)[0]


def ode_rk4_fused(Y, w_all, *, dt, n_steps):
    """n_steps of RK4 (4 f-evals each) fused into one pallas_call. Y: (B, 5)."""
    B = Y.shape[0]
    b_pad = _round_up(max(B, 1), MIN_LANES)
    y_pad = jnp.zeros((DIM_PAD, b_pad), jnp.float32).at[:IN_DIM, :B].set(
        Y.astype(jnp.float32).T)
    out = pl.pallas_call(
        functools.partial(rk4_fused_kernel, dt=float(dt), n_steps=int(n_steps)),
        out_shape=jax.ShapeDtypeStruct((DIM_PAD, b_pad), jnp.float32),
    )(y_pad, w_all)
    return out[:IN_DIM, :B].T


# ----------------------------------------------------------------------------
# Pure-JAX references.
# ----------------------------------------------------------------------------
def ode_func_ref(t, y, weights):
    """Pure-JAX reference mirroring the PyTorch forward (single state y: (5,))."""
    del t
    h = y
    for w in weights[:-1]:
        h = jnp.tanh(h @ w.T)
    net_out = h @ weights[-1].T                                      # (4,)
    alg = y[4] * (y[0] ** 2 + y[1] ** 2) + G * y[1] - (y[2] ** 2 + y[3] ** 2)
    return jnp.concatenate([net_out, alg[None]])


def rk4_ref(y, weights, dt, n_steps):
    def step(yc, _):
        k1 = ode_func_ref(0.0, yc, weights)
        k2 = ode_func_ref(0.0, yc + 0.5 * dt * k1, weights)
        k3 = ode_func_ref(0.0, yc + 0.5 * dt * k2, weights)
        k4 = ode_func_ref(0.0, yc + dt * k3, weights)
        return yc + (dt / 6.0) * (k1 + 2.0 * k2 + 2.0 * k3 + k4), None
    y_out, _ = lax.scan(step, y, None, length=n_steps)
    return y_out


if __name__ == "__main__":
    key = jax.random.PRNGKey(0)
    k_w, k_y, k_Y = jax.random.split(key, 3)

    weights = make_params(k_w)
    w_f32 = pack_weights(weights, jnp.float32)   # hoisted: done once, not per ODE step

    t = jnp.float32(0.0)

    # single-state path (matches the PyTorch forward exactly)
    y = jax.random.normal(k_y, (IN_DIM,), dtype=jnp.float32)
    f = jax.block_until_ready(ode_func(t, y, w_f32))
    f_ref = ode_func_ref(t, y, weights)
    assert f.shape == (IN_DIM,) and f.dtype == jnp.float32
    assert jnp.allclose(f, f_ref, rtol=1e-3, atol=1e-5), (f, f_ref)

    # batched path: exercises the lane-tiled parallel grid (>=2 blocks)
    B = 300
    Y = jax.random.normal(k_Y, (B, IN_DIM), dtype=jnp.float32)
    F = jax.block_until_ready(jax.jit(ode_func_batched)(t, Y, w_f32))
    F_ref = jax.vmap(lambda yy: ode_func_ref(t, yy, weights))(Y)
    assert F.shape == (B, IN_DIM) and F.dtype == jnp.float32
    assert jnp.allclose(F, F_ref, rtol=1e-3, atol=1e-5)

    # small-batch path (single tile, no grid)
    F6 = jax.block_until_ready(ode_func_batched(t, Y[:6], w_f32))
    assert jnp.allclose(F6, F_ref[:6], rtol=1e-3, atol=1e-5)

    # fused multi-step RK4: all stage f-evals of 10 steps in one pallas_call
    n_steps, dt = 10, 0.01
    Yb = Y[:8]
    Y_out = jax.block_until_ready(ode_rk4_fused(Yb, w_f32, dt=dt, n_steps=n_steps))
    Y_out_ref = jax.vmap(lambda yy: rk4_ref(yy, weights, dt, n_steps))(Yb)
    assert Y_out.shape == (8, IN_DIM)
    assert jnp.allclose(Y_out, Y_out_ref, rtol=1e-3, atol=1e-5)

    # optional bf16 MLP fast path on chips with bf16 VPU/EUP (v6e / v7x only)
    cd = pick_compute_dtype()
    if cd == jnp.bfloat16:
        w_bf16 = pack_weights(weights, jnp.bfloat16)
        F_bf = jax.block_until_ready(jax.jit(ode_func_batched)(t, Y, w_bf16))
        assert F_bf.shape == (B, IN_DIM) and bool(jnp.all(jnp.isfinite(F_bf)))
        # reduced-precision fast path: magnitude-scaled sanity bound only
        assert float(jnp.max(jnp.abs(F_bf - F_ref))) <= \
            0.05 * float(jnp.max(jnp.abs(F_ref))) + 1e-6

    print("KERNEL_OK")
</pallas_src>

<mosaic_0001>
module attributes {stable_mosaic.version = 11 : i64} {
  func.func @odefunc_kernel(%arg0: memref<16x128xf32, #tpu.memory_space<vmem>>, %arg1: memref<5x16x16xf32, #tpu.memory_space<vmem>>, %arg2: memref<16x128xf32, #tpu.memory_space<vmem>>) attributes {dimension_semantics = [], scalar_prefetch = 0 : i64, scratch_operands = 0 : i64, tpu.core_type = #tpu.core_type<tc>} {
    %c0 = arith.constant 0 : index
    %c0_0 = arith.constant 0 : index
    %0 = vector.load %arg0[%c0, %c0_0] : memref<16x128xf32, #tpu.memory_space<vmem>>, vector<16x128xf32>
    %c0_1 = arith.constant 0 : index
    %c0_2 = arith.constant 0 : index
    %c0_3 = arith.constant 0 : index
    %1 = vector.load %arg1[%c0_1, %c0_2, %c0_3] : memref<5x16x16xf32, #tpu.memory_space<vmem>>, vector<5x16x16xf32>
    %2 = vector.extract_strided_slice %1 {offsets = [0, 0, 0], sizes = [1, 16, 16], strides = [1, 1, 1]} : vector<5x16x16xf32> to vector<1x16x16xf32>
    %3 = vector.shape_cast %2 : vector<1x16x16xf32> to vector<16x16xf32>
    %cst = arith.constant dense<0.000000e+00> : vector<16x128xf32>
    %4 = tpu.matmul %3, %0, %cst {dimension_numbers = #tpu.dot_dimension_numbers<[1], [0], [0], [1], [0, 0, 1, 1], [], []>} : vector<16x16xf32>, vector<16x128xf32>, vector<16x128xf32> -> vector<16x128xf32>
    %5 = math.tanh %4 : vector<16x128xf32>
    %6 = vector.extract_strided_slice %1 {offsets = [1, 0, 0], sizes = [1, 16, 16], strides = [1, 1, 1]} : vector<5x16x16xf32> to vector<1x16x16xf32>
    %7 = vector.shape_cast %6 : vector<1x16x16xf32> to vector<16x16xf32>
    %cst_4 = arith.constant dense<0.000000e+00> : vector<16x128xf32>
    %8 = tpu.matmul %7, %5, %cst_4 {dimension_numbers = #tpu.dot_dimension_numbers<[1], [0], [0], [1], [0, 0, 1, 1], [], []>} : vector<16x16xf32>, vector<16x128xf32>, vector<16x128xf32> -> vector<16x128xf32>
    %9 = math.tanh %8 : vector<16x128xf32>
    %10 = vector.extract_strided_slice %1 {offsets = [2, 0, 0], sizes = [1, 16, 16], strides = [1, 1, 1]} : vector<5x16x16xf32> to vector<1x16x16xf32>
    %11 = vector.shape_cast %10 : vector<1x16x16xf32> to vector<16x16xf32>
    %cst_5 = arith.constant dense<0.000000e+00> : vector<16x128xf32>
    %12 = tpu.matmul %11, %9, %cst_5 {dimension_numbers = #tpu.dot_dimension_numbers<[1], [0], [0], [1], [0, 0, 1, 1], [], []>} : vector<16x16xf32>, vector<16x128xf32>, vector<16x128xf32> -> vector<16x128xf32>
    %13 = math.tanh %12 : vector<16x128xf32>
    %14 = vector.extract_strided_slice %1 {offsets = [3, 0, 0], sizes = [1, 16, 16], strides = [1, 1, 1]} : vector<5x16x16xf32> to vector<1x16x16xf32>
    %15 = vector.shape_cast %14 : vector<1x16x16xf32> to vector<16x16xf32>
    %cst_6 = arith.constant dense<0.000000e+00> : vector<16x128xf32>
    %16 = tpu.matmul %15, %13, %cst_6 {dimension_numbers = #tpu.dot_dimension_numbers<[1], [0], [0], [1], [0, 0, 1, 1], [], []>} : vector<16x16xf32>, vector<16x128xf32>, vector<16x128xf32> -> vector<16x128xf32>
    %17 = math.tanh %16 : vector<16x128xf32>
    %18 = vector.extract_strided_slice %1 {offsets = [4, 0, 0], sizes = [1, 16, 16], strides = [1, 1, 1]} : vector<5x16x16xf32> to vector<1x16x16xf32>
    %19 = vector.shape_cast %18 : vector<1x16x16xf32> to vector<16x16xf32>
    %cst_7 = arith.constant dense<0.000000e+00> : vector<16x128xf32>
    %20 = tpu.matmul %19, %17, %cst_7 {dimension_numbers = #tpu.dot_dimension_numbers<[1], [0], [0], [1], [0, 0, 1, 1], [], []>} : vector<16x16xf32>, vector<16x128xf32>, vector<16x128xf32> -> vector<16x128xf32>
    %21 = vector.extract_strided_slice %0 {offsets = [0, 0], sizes = [1, 128], strides = [1, 1]} : vector<16x128xf32> to vector<1x128xf32>
    %22 = vector.extract_strided_slice %0 {offsets = [1, 0], sizes = [1, 128], strides = [1, 1]} : vector<16x128xf32> to vector<1x128xf32>
    %23 = vector.extract_strided_slice %0 {offsets = [2, 0], sizes = [1, 128], strides = [1, 1]} : vector<16x128xf32> to vector<1x128xf32>
    %24 = vector.extract_strided_slice %0 {offsets = [3, 0], sizes = [1, 128], strides = [1, 1]} : vector<16x128xf32> to vector<1x128xf32>
    %25 = vector.extract_strided_slice %0 {offsets = [4, 0], sizes = [1, 128], strides = [1, 1]} : vector<16x128xf32> to vector<1x128xf32>
    %26 = arith.mulf %21, %21 : vector<1x128xf32>
    %27 = arith.mulf %22, %22 : vector<1x128xf32>
    %28 = arith.addf %26, %27 : vector<1x128xf32>
    %29 = arith.mulf %25, %28 : vector<1x128xf32>
    %cst_8 = arith.constant 9.810000e+00 : f32
    %30 = vector.broadcast %cst_8 : f32 to vector<1x128xf32>
    %31 = arith.mulf %30, %22 : vector<1x128xf32>
    %32 = arith.addf %29, %31 : vector<1x128xf32>
    %33 = arith.mulf %23, %23 : vector<1x128xf32>
    %34 = arith.mulf %24, %24 : vector<1x128xf32>
    %35 = arith.addf %33, %34 : vector<1x128xf32>
    %36 = arith.subf %32, %35 : vector<1x128xf32>
    %37 = tpu.iota {dimensions = array<i32: 0>} : vector<16x128xi32>
    %c4_i32 = arith.constant 4 : i32
    %38 = vector.broadcast %c4_i32 : i32 to vector<16x128xi32>
    %39 = arith.cmpi eq, %37, %38 : vector<16x128xi32>
    %40 = vector.shape_cast %36 : vector<1x128xf32> to vector<1x128xf32>
    %41 = vector.broadcast %40 : vector<1x128xf32> to vector<16x128xf32>
    %42 = arith.select %39, %41, %20 : vector<16x128xi1>, vector<16x128xf32>
    %c0_9 = arith.constant 0 : index
    %c0_10 = arith.constant 0 : index
    %43 = vector.load %arg2[%c0_9, %c0_10] : memref<16x128xf32, #tpu.memory_space<vmem>>, vector<16x128xf32>
    tpu.vector_store %arg2[%c0_9, %c0_10], %42 {strides = array<i32>} : memref<16x128xf32, #tpu.memory_space<vmem>>, vector<16x128xf32>,
    return
  }
}

</mosaic_0001>

<llo_original>
// kernel: tpu_custom_call.1
$region0: #{tpu_custom_call.1}
  #allocation0 [shape = 'u32[]', space=smem, size = 0x4, offset = 0x4, fixed_abs, tag = 'smem constant byte address 0x4 - core index']
  #allocation1 [shape = 'u32[144,128]{1,0:T(1,128)}', space=vmem, size = 0x12000, scoped, tag = 'internal scratch']
  %s0 = inlined_call_operand.hbm [shape: f32[16,128], index: 0, kind: input, shape index: {}]
  %s1 = inlined_call_operand.hbm [shape: f32[5,16,16], index: 1, kind: input, shape index: {}]
  %s2 = inlined_call_operand.hbm [shape: f32[16,128], index: 2, kind: output, shape index: {}]
  %s3 = sld [smem:[#allocation0]]
  $region26: #{tpu_custom_call.1} parent=0
    _
  %s5 = ssub.s32 1, %s3
  %s6 = scalar_select 0, %s5, %s3
  $region1: #{tpu_custom_call.1} parent=0
    #allocation2 [shape = 'u8[8192]{0}', space=vmem, size = 0x2000, scoped, tag = 'input window, operand 0, single buffered']
    #allocation3 [shape = 's32[1]{0}', space=sflag, size = 0x4, scoped, tag = 'scoped memory for tpu_custom_call.1']
    #allocation4 [shape = 's32[1]{0}', space=sflag, size = 0x4, scoped, tag = 'scoped memory for tpu_custom_call.1']
    #allocation5 [shape = 'u8[40960]{0}', space=vmem, size = 0xa000, scoped, tag = 'input window, operand 1, single buffered']
    #allocation6 [shape = 's32[1]{0}', space=sflag, size = 0x4, scoped, tag = 'scoped memory for tpu_custom_call.1']
    #allocation7 [shape = 'u8[8192]{0}', space=vmem, size = 0x2000, scoped, tag = 'output window, operand 0, single buffered']
    %7 = vsyncpa [#allocation3], 0
    %8 = vsyncpa [#allocation6], 0
    %9 = vsyncpa [#allocation4], 0
    // Predicated region
    $region2: #{tpu_custom_call.1} parent=1 // pred_check
      _
    $region3: #{tpu_custom_call.1} parent=1 // pred_check_branch
      %11 = sbr.rel (0) target = $region5
    $region4: #{tpu_custom_call.1} parent=1 // pred_region
      %s13 = ssub.s32 256, 256
      %14 = vsyncadd [#allocation3], %s13
      %s15 = sshll.u32 [#allocation2], 4
      %s16 = int_to_ptr.vmem [resolvable:$true] %s15
      %21 = dma.hbm_to_vmem [thread:$0]  %s0, 256, %s16, [#allocation3], 128, 128, 8
    $region5: #{tpu_custom_call.1} parent=1 // pred_fallthru
      _
    // Predicated region
    $region6: #{tpu_custom_call.1} parent=1 // pred_check
      _
    $region7: #{tpu_custom_call.1} parent=1 // pred_check_branch
      %23 = sbr.rel (0) target = $region9
    $region8: #{tpu_custom_call.1} parent=1 // pred_region
      %s25 = ssub.s32 1280, 1280
      %26 = vsyncadd [#allocation6], %s25
      %s27 = sshll.u32 [#allocation5], 4
      %s28 = int_to_ptr.vmem [resolvable:$true] %s27
      %33 = dma.hbm_to_vmem [thread:$0]  %s1, 1280, %s28, [#allocation6], 128, 128, 8
    $region9: #{tpu_custom_call.1} parent=1 // pred_fallthru
      _
    // Predicated region
    $region10: #{tpu_custom_call.1} parent=1 // pred_check
      _
    $region11: #{tpu_custom_call.1} parent=1 // pred_check_branch
      %35 = sbr.rel (0) target = $region13
    $region12: #{tpu_custom_call.1} parent=1 // pred_region
      %36 = dma.done [#allocation3], 256
    $region13: #{tpu_custom_call.1} parent=1 // pred_fallthru
      _
    // Predicated region
    $region14: #{tpu_custom_call.1} parent=1 // pred_check
      _
    $region15: #{tpu_custom_call.1} parent=1 // pred_check_branch
      %38 = sbr.rel (0) target = $region17
    $region16: #{tpu_custom_call.1} parent=1 // pred_region
      %39 = dma.done [#allocation6], 1280
    $region17: #{tpu_custom_call.1} parent=1 // pred_fallthru
      _
    %v40 = vld [vmem:[#allocation2] sm:$0xff]
    %v41 = vld [vmem:[#allocation2 + $0x8] sm:$0xff]
    %v42 = vld [vmem:[#allocation5] sm:$0xff]
    %v43 = vld [vmem:[#allocation5 + $0x8] sm:$0xff]
    %v44 = vld [vmem:[#allocation5 + $0x10] sm:$0xff]
    %v45 = vld [vmem:[#allocation5 + $0x18] sm:$0xff]
    %v46 = vld [vmem:[#allocation5 + $0x20] sm:$0xff]
    %v47 = vld [vmem:[#allocation5 + $0x28] sm:$0xff]
    %v48 = vld [vmem:[#allocation5 + $0x30] sm:$0xff]
    %v49 = vld [vmem:[#allocation5 + $0x38] sm:$0xff]
    %v50 = vld [vmem:[#allocation5 + $0x40] sm:$0xff]
    %v51 = vld [vmem:[#allocation5 + $0x48] sm:$0xff]
    %vm52 = vcmask 130048
    %v54 = vsel %vm52, %v42, 0
    %v57 = vsel %vm52, %v43, 0
    %59 = vmatprep.subr.mxu0 0.0
    %60 = vmatpush1.msra.mxu0 0.0
    %61 = vmatprep.subr.mxu0 0.0
    %62 = vmatpush1.msra.mxu0 0.0
    %63 = vmatprep.subr.mxu0 0.0
    %64 = vmatpush1.msra.mxu0 0.0
    %65 = vmatprep.subr.mxu0 0.0
    %66 = vmatpush1.msra.mxu0 0.0
    %67 = vmatprep.subr.mxu0 0.0
    %68 = vmatpush1.msra.mxu0 0.0
    %69 = vmatprep.subr.mxu0 0.0
    %70 = vmatpush1.msra.mxu0 0.0
    %71 = vmatprep.subr.mxu0 0.0
    %72 = vmatpush1.msra.mxu0 0.0
    %73 = vmatprep.subr.mxu0 0.0
    %74 = vmatpush1.msra.mxu0 0.0
    %75 = vmatprep.subr.mxu0 0.0
    %76 = vmatpush1.msra.mxu0 0.0
    %77 = vmatprep.subr.mxu0 0.0
    %78 = vmatpush1.msra.mxu0 0.0
    %79 = vmatprep.subr.mxu0 0.0
    %80 = vmatpush1.msra.mxu0 0.0
    %81 = vmatprep.subr.mxu0 0.0
    %82 = vmatpush1.msra.mxu0 0.0
    %83 = vmatprep.subr.mxu0 0.0
    %84 = vmatpush1.msra.mxu0 0.0
    %85 = vmatprep.subr.mxu0 0.0
    %86 = vmatpush1.msra.mxu0 0.0
    %87 = vmatprep.subr.mxu0 0.0
    %88 = vmatpush1.msra.mxu0 %v41
    %89 = vmatprep.subr.mxu0 0.0
    %90 = vmatpush1.msra.mxu0 %v40
    %91 = vmatprep.subr.mxu0 0.0
    %92 = vmatpush2.msra.mxu0 0.0
    %93 = vmatprep.subr.mxu0 0.0
    %94 = vmatpush2.msra.mxu0 0.0
    %95 = vmatprep.subr.mxu0 0.0
    %96 = vmatpush2.msra.mxu0 0.0
    %97 = vmatprep.subr.mxu0 0.0
    %98 = vmatpush2.msra.mxu0 0.0
    %99 = vmatprep.subr.mxu0 0.0
    %100 = vmatpush2.msra.mxu0 0.0
    %101 = vmatprep.subr.mxu0 0.0
    %102 = vmatpush2.msra.mxu0 0.0
    %103 = vmatprep.subr.mxu0 0.0
    %104 = vmatpush2.msra.mxu0 0.0
    %105 = vmatprep.subr.mxu0 0.0
    %106 = vmatpush2.msra.mxu0 0.0
    %107 = vmatprep.subr.mxu0 0.0
    %108 = vmatpush2.msra.mxu0 0.0
    %109 = vmatprep.subr.mxu0 0.0
    %110 = vmatpush2.msra.mxu0 0.0
    %111 = vmatprep.subr.mxu0 0.0
    %112 = vmatpush2.msra.mxu0 0.0
    %113 = vmatprep.subr.mxu0 0.0
    %114 = vmatpush2.msra.mxu0 0.0
    %115 = vmatprep.subr.mxu0 0.0
    %116 = vmatpush2.msra.mxu0 0.0
    %117 = vmatprep.subr.mxu0 0.0
    %118 = vmatpush2.msra.mxu0 0.0
    %119 = vmatprep.subr.mxu0 0.0
    %120 = vmatpush2.msra.mxu0 0.0
    %121 = vmatprep.subr.mxu0 0.0
    %122 = vmatpush2.msra.mxu0 0.0
    %123 = vmatprep.mubr.f32.mxu0 0.0
    %124 = vmatmul.mubr.f32.gmra.mxu0 %v54
    %v125 = vpop.f32.mrf.mxu0
    %v126 = vadd.f32 0.0, %v125
    %v127 = vpop.f32.mrf.mxu0
    %128 = vmatprep.mubr.f32.mxu0 0.0
    %129 = vmatmul.mubr.f32.gmra.mxu0 %v57
    %v130 = vpop.f32.mrf.mxu0
    %v131 = vadd.f32 0.0, %v130
    %v132 = vpop.f32.mrf.mxu0
    %133 = vdwg.mxu0
    %v134 = vtanh.pop %v126
    %v135 = vtanh.pop %v131
    %v137 = vsel %vm52, %v44, 0
    %v140 = vsel %vm52, %v45, 0
    %142 = vmatprep.subr.mxu0 0.0
    %143 = vmatpush1.msra.mxu0 0.0
    %144 = vmatprep.subr.mxu0 0.0
    %145 = vmatpush1.msra.mxu0 0.0
    %146 = vmatprep.subr.mxu0 0.0
    %147 = vmatpush1.msra.mxu0 0.0
    %148 = vmatprep.subr.mxu0 0.0
    %149 = vmatpush1.msra.mxu0 0.0
    %150 = vmatprep.subr.mxu0 0.0
    %151 = vmatpush1.msra.mxu0 0.0
    %152 = vmatprep.subr.mxu0 0.0
    %153 = vmatpush1.msra.mxu0 0.0
    %154 = vmatprep.subr.mxu0 0.0
    %155 = vmatpush1.msra.mxu0 0.0
    %156 = vmatprep.subr.mxu0 0.0
    %157 = vmatpush1.msra.mxu0 0.0
    %158 = vmatprep.subr.mxu0 0.0
    %159 = vmatpush1.msra.mxu0 0.0
    %160 = vmatprep.subr.mxu0 0.0
    %161 = vmatpush1.msra.mxu0 0.0
    %162 = vmatprep.subr.mxu0 0.0
    %163 = vmatpush1.msra.mxu0 0.0
    %164 = vmatprep.subr.mxu0 0.0
    %165 = vmatpush1.msra.mxu0 0.0
    %166 = vmatprep.subr.mxu0 0.0
    %167 = vmatpush1.msra.mxu0 0.0
    %168 = vmatprep.subr.mxu0 0.0
    %169 = vmatpush1.msra.mxu0 0.0
    %170 = vmatprep.subr.mxu0 0.0
    %171 = vmatpush1.msra.mxu0 %v135
    %172 = vmatprep.subr.mxu0 0.0
    %173 = vmatpush1.msra.mxu0 %v134
    %174 = vmatprep.subr.mxu0 0.0
    %175 = vmatpush2.msra.mxu0 0.0
    %176 = vmatprep.subr.mxu0 0.0
    %177 = vmatpush2.msra.mxu0 0.0
    %178 = vmatprep.subr.mxu0 0.0
    %179 = vmatpush2.msra.mxu0 0.0
    %180 = vmatprep.subr.mxu0 0.0
    %181 = vmatpush2.msra.mxu0 0.0
    %182 = vmatprep.subr.mxu0 0.0
    %183 = vmatpush2.msra.mxu0 0.0
    %184 = vmatprep.subr.mxu0 0.0
    %185 = vmatpush2.msra.mxu0 0.0
    %186 = vmatprep.subr.mxu0 0.0
    %187 = vmatpush2.msra.mxu0 0.0
    %188 = vmatprep.subr.mxu0 0.0
    %189 = vmatpush2.msra.mxu0 0.0
    %190 = vmatprep.subr.mxu0 0.0
    %191 = vmatpush2.msra.mxu0 0.0
    %192 = vmatprep.subr.mxu0 0.0
    %193 = vmatpush2.msra.mxu0 0.0
    %194 = vmatprep.subr.mxu0 0.0
    %195 = vmatpush2.msra.mxu0 0.0
    %196 = vmatprep.subr.mxu0 0.0
    %197 = vmatpush2.msra.mxu0 0.0
    %198 = vmatprep.subr.mxu0 0.0
    %199 = vmatpush2.msra.mxu0 0.0
    %200 = vmatprep.subr.mxu0 0.0
    %201 = vmatpush2.msra.mxu0 0.0
    %202 = vmatprep.subr.mxu0 0.0
    %203 = vmatpush2.msra.mxu0 0.0
    %204 = vmatprep.subr.mxu0 0.0
    %205 = vmatpush2.msra.mxu0 0.0
    %206 = vmatprep.mubr.f32.mxu0 0.0
    %207 = vmatmul.mubr.f32.gmra.mxu0 %v137
    %v208 = vpop.f32.mrf.mxu0
    %v209 = vadd.f32 0.0, %v208
    %v210 = vpop.f32.mrf.mxu0
    %211 = vmatprep.mubr.f32.mxu0 0.0
    %212 = vmatmul.mubr.f32.gmra.mxu0 %v140
    %v213 = vpop.f32.mrf.mxu0
    %v214 = vadd.f32 0.0, %v213
    %v215 = vpop.f32.mrf.mxu0
    %216 = vdwg.mxu0
    %v217 = vtanh.pop %v209
    %v218 = vtanh.pop %v214
    %v220 = vsel %vm52, %v46, 0
    %v223 = vsel %vm52, %v47, 0
    %225 = vmatprep.subr.mxu0 0.0
    %226 = vmatpush1.msra.mxu0 0.0
    %227 = vmatprep.subr.mxu0 0.0
    %228 = vmatpush1.msra.mxu0 0.0
    %229 = vmatprep.subr.mxu0 0.0
    %230 = vmatpush1.msra.mxu0 0.0
    %231 = vmatprep.subr.mxu0 0.0
    %232 = vmatpush1.msra.mxu0 0.0
    %233 = vmatprep.subr.mxu0 0.0
    %234 = vmatpush1.msra.mxu0 0.0
    %235 = vmatprep.subr.mxu0 0.0
    %236 = vmatpush1.msra.mxu0 0.0
    %237 = vmatprep.subr.mxu0 0.0
    %238 = vmatpush1.msra.mxu0 0.0
    %239 = vmatprep.subr.mxu0 0.0
    %240 = vmatpush1.msra.mxu0 0.0
    %241 = vmatprep.subr.mxu0 0.0
    %242 = vmatpush1.msra.mxu0 0.0
    %243 = vmatprep.subr.mxu0 0.0
    %244 = vmatpush1.msra.mxu0 0.0
    %245 = vmatprep.subr.mxu0 0.0
    %246 = vmatpush1.msra.mxu0 0.0
    %247 = vmatprep.subr.mxu0 0.0
    %248 = vmatpush1.msra.mxu0 0.0
    %249 = vmatprep.subr.mxu0 0.0
    %250 = vmatpush1.msra.mxu0 0.0
    %251 = vmatprep.subr.mxu0 0.0
    %252 = vmatpush1.msra.mxu0 0.0
    %253 = vmatprep.subr.mxu0 0.0
    %254 = vmatpush1.msra.mxu0 %v218
    %255 = vmatprep.subr.mxu0 0.0
    %256 = vmatpush1.msra.mxu0 %v217
    %257 = vmatprep.subr.mxu0 0.0
    %258 = vmatpush2.msra.mxu0 0.0
    %259 = vmatprep.subr.mxu0 0.0
    %260 = vmatpush2.msra.mxu0 0.0
    %261 = vmatprep.subr.mxu0 0.0
    %262 = vmatpush2.msra.mxu0 0.0
    %263 = vmatprep.subr.mxu0 0.0
    %264 = vmatpush2.msra.mxu0 0.0
    %265 = vmatprep.subr.mxu0 0.0
    %266 = vmatpush2.msra.mxu0 0.0
    %267 = vmatprep.subr.mxu0 0.0
    %268 = vmatpush2.msra.mxu0 0.0
    %269 = vmatprep.subr.mxu0 0.0
    %270 = vmatpush2.msra.mxu0 0.0
    %271 = vmatprep.subr.mxu0 0.0
    %272 = vmatpush2.msra.mxu0 0.0
    %273 = vmatprep.subr.mxu0 0.0
    %274 = vmatpush2.msra.mxu0 0.0
    %275 = vmatprep.subr.mxu0 0.0
    %276 = vmatpush2.msra.mxu0 0.0
    %277 = vmatprep.subr.mxu0 0.0
    %278 = vmatpush2.msra.mxu0 0.0
    %279 = vmatprep.subr.mxu0 0.0
    %280 = vmatpush2.msra.mxu0 0.0
    %281 = vmatprep.subr.mxu0 0.0
    %282 = vmatpush2.msra.mxu0 0.0
    %283 = vmatprep.subr.mxu0 0.0
    %284 = vmatpush2.msra.mxu0 0.0
    %285 = vmatprep.subr.mxu0 0.0
    %286 = vmatpush2.msra.mxu0 0.0
    %287 = vmatprep.subr.mxu0 0.0
    %288 = vmatpush2.msra.mxu0 0.0
    %289 = vmatprep.mubr.f32.mxu0 0.0
    %290 = vmatmul.mubr.f32.gmra.mxu0 %v220
    %v291 = vpop.f32.mrf.mxu0
    %v292 = vadd.f32 0.0, %v291
    %v293 = vpop.f32.mrf.mxu0
    %294 = vmatprep.mubr.f32.mxu0 0.0
    %295 = vmatmul.mubr.f32.gmra.mxu0 %v223
    %v296 = vpop.f32.mrf.mxu0
    %v297 = vadd.f32 0.0, %v296
    %v298 = vpop.f32.mrf.mxu0
    %299 = vdwg.mxu0
    %v300 = vtanh.pop %v292
    %v301 = vtanh.pop %v297
    %v303 = vsel %vm52, %v48, 0
    %v306 = vsel %vm52, %v49, 0
    %308 = vmatprep.subr.mxu0 0.0
    %309 = vmatpush1.msra.mxu0 0.0
    %310 = vmatprep.subr.mxu0 0.0
    %311 = vmatpush1.msra.mxu0 0.0
    %312 = vmatprep.subr.mxu0 0.0
    %313 = vmatpush1.msra.mxu0 0.0
    %314 = vmatprep.subr.mxu0 0.0
    %315 = vmatpush1.msra.mxu0 0.0
    %316 = vmatprep.subr.mxu0 0.0
    %317 = vmatpush1.msra.mxu0 0.0
    %318 = vmatprep.subr.mxu0 0.0
    %319 = vmatpush1.msra.mxu0 0.0
    %320 = vmatprep.subr.mxu0 0.0
    %321 = vmatpush1.msra.mxu0 0.0
    %322 = vmatprep.subr.mxu0 0.0
    %323 = vmatpush1.msra.mxu0 0.0
    %324 = vmatprep.subr.mxu0 0.0
    %325 = vmatpush1.msra.mxu0 0.0
    %326 = vmatprep.subr.mxu0 0.0
    %327 = vmatpush1.msra.mxu0 0.0
    %328 = vmatprep.subr.mxu0 0.0
    %329 = vmatpush1.msra.mxu0 0.0
    %330 = vmatprep.subr.mxu0 0.0
    %331 = vmatpush1.msra.mxu0 0.0
    %332 = vmatprep.subr.mxu0 0.0
    %333 = vmatpush1.msra.mxu0 0.0
    %334 = vmatprep.subr.mxu0 0.0
    %335 = vmatpush1.msra.mxu0 0.0
    %336 = vmatprep.subr.mxu0 0.0
    %337 = vmatpush1.msra.mxu0 %v301
    %338 = vmatprep.subr.mxu0 0.0
    %339 = vmatpush1.msra.mxu0 %v300
    %340 = vmatprep.subr.mxu0 0.0
    %341 = vmatpush2.msra.mxu0 0.0
    %342 = vmatprep.subr.mxu0 0.0
    %343 = vmatpush2.msra.mxu0 0.0
    %344 = vmatprep.subr.mxu0 0.0
    %345 = vmatpush2.msra.mxu0 0.0
    %346 = vmatprep.subr.mxu0 0.0
    %347 = vmatpush2.msra.mxu0 0.0
    %348 = vmatprep.subr.mxu0 0.0
    %349 = vmatpush2.msra.mxu0 0.0
    %350 = vmatprep.subr.mxu0 0.0
    %351 = vmatpush2.msra.mxu0 0.0
    %352 = vmatprep.subr.mxu0 0.0
    %353 = vmatpush2.msra.mxu0 0.0
    %354 = vmatprep.subr.mxu0 0.0
    %355 = vmatpush2.msra.mxu0 0.0
    %356 = vmatprep.subr.mxu0 0.0
    %357 = vmatpush2.msra.mxu0 0.0
    %358 = vmatprep.subr.mxu0 0.0
    %359 = vmatpush2.msra.mxu0 0.0
    %360 = vmatprep.subr.mxu0 0.0
    %361 = vmatpush2.msra.mxu0 0.0
    %362 = vmatprep.subr.mxu0 0.0
    %363 = vmatpush2.msra.mxu0 0.0
    %364 = vmatprep.subr.mxu0 0.0
    %365 = vmatpush2.msra.mxu0 0.0
    %366 = vmatprep.subr.mxu0 0.0
    %367 = vmatpush2.msra.mxu0 0.0
    %368 = vmatprep.subr.mxu0 0.0
    %369 = vmatpush2.msra.mxu0 0.0
    %370 = vmatprep.subr.mxu0 0.0
    %371 = vmatpush2.msra.mxu0 0.0
    %372 = vmatprep.mubr.f32.mxu0 0.0
    %373 = vmatmul.mubr.f32.gmra.mxu0 %v303
    %v374 = vpop.f32.mrf.mxu0
    %v375 = vadd.f32 0.0, %v374
    %v376 = vpop.f32.mrf.mxu0
    %377 = vmatprep.mubr.f32.mxu0 0.0
    %378 = vmatmul.mubr.f32.gmra.mxu0 %v306
    %v379 = vpop.f32.mrf.mxu0
    %v380 = vadd.f32 0.0, %v379
    %v381 = vpop.f32.mrf.mxu0
    %382 = vdwg.mxu0
    %v383 = vtanh.pop %v375
    %v384 = vtanh.pop %v380
    %v386 = vsel %vm52, %v50, 0
    %v389 = vsel %vm52, %v51, 0
    %391 = vmatprep.subr.mxu0 0.0
    %392 = vmatpush1.msra.mxu0 0.0
    %393 = vmatprep.subr.mxu0 0.0
    %394 = vmatpush1.msra.mxu0 0.0
    %395 = vmatprep.subr.mxu0 0.0
    %396 = vmatpush1.msra.mxu0 0.0
    %397 = vmatprep.subr.mxu0 0.0
    %398 = vmatpush1.msra.mxu0 0.0
    %399 = vmatprep.subr.mxu0 0.0
    %400 = vmatpush1.msra.mxu0 0.0
    %401 = vmatprep.subr.mxu0 0.0
    %402 = vmatpush1.msra.mxu0 0.0
    %403 = vmatprep.subr.mxu0 0.0
    %404 = vmatpush1.msra.mxu0 0.0
    %405 = vmatprep.subr.mxu0 0.0
    %406 = vmatpush1.msra.mxu0 0.0
    %407 = vmatprep.subr.mxu0 0.0
    %408 = vmatpush1.msra.mxu0 0.0
    %409 = vmatprep.subr.mxu0 0.0
    %410 = vmatpush1.msra.mxu0 0.0
    %411 = vmatprep.subr.mxu0 0.0
    %412 = vmatpush1.msra.mxu0 0.0
    %413 = vmatprep.subr.mxu0 0.0
    %414 = vmatpush1.msra.mxu0 0.0
    %415 = vmatprep.subr.mxu0 0.0
    %416 = vmatpush1.msra.mxu0 0.0
    %417 = vmatprep.subr.mxu0 0.0
    %418 = vmatpush1.msra.mxu0 0.0
    %419 = vmatprep.subr.mxu0 0.0
    %420 = vmatpush1.msra.mxu0 %v384
    %421 = vmatprep.subr.mxu0 0.0
    %422 = vmatpush1.msra.mxu0 %v383
    %423 = vmatprep.subr.mxu0 0.0
    %424 = vmatpush2.msra.mxu0 0.0
    %425 = vmatprep.subr.mxu0 0.0
    %426 = vmatpush2.msra.mxu0 0.0
    %427 = vmatprep.subr.mxu0 0.0
    %428 = vmatpush2.msra.mxu0 0.0
    %429 = vmatprep.subr.mxu0 0.0
    %430 = vmatpush2.msra.mxu0 0.0
    %431 = vmatprep.subr.mxu0 0.0
    %432 = vmatpush2.msra.mxu0 0.0
    %433 = vmatprep.subr.mxu0 0.0
    %434 = vmatpush2.msra.mxu0 0.0
    %435 = vmatprep.subr.mxu0 0.0
    %436 = vmatpush2.msra.mxu0 0.0
    %437 = vmatprep.subr.mxu0 0.0
    %438 = vmatpush2.msra.mxu0 0.0
    %439 = vmatprep.subr.mxu0 0.0
    %440 = vmatpush2.msra.mxu0 0.0
    %441 = vmatprep.subr.mxu0 0.0
    %442 = vmatpush2.msra.mxu0 0.0
    %443 = vmatprep.subr.mxu0 0.0
    %444 = vmatpush2.msra.mxu0 0.0
    %445 = vmatprep.subr.mxu0 0.0
    %446 = vmatpush2.msra.mxu0 0.0
    %447 = vmatprep.subr.mxu0 0.0
    %448 = vmatpush2.msra.mxu0 0.0
    %449 = vmatprep.subr.mxu0 0.0
    %450 = vmatpush2.msra.mxu0 0.0
    %451 = vmatprep.subr.mxu0 0.0
    %452 = vmatpush2.msra.mxu0 0.0
    %453 = vmatprep.subr.mxu0 0.0
    %454 = vmatpush2.msra.mxu0 0.0
    %455 = vmatprep.mubr.f32.mxu0 0.0
    %456 = vmatmul.mubr.f32.gmra.mxu0 %v386
    %v457 = vpop.f32.mrf.mxu0
    %v458 = vadd.f32 0.0, %v457
    %v459 = vpop.f32.mrf.mxu0
    %460 = vmatprep.mubr.f32.mxu0 0.0
    %461 = vmatmul.mubr.f32.gmra.mxu0 %v389
    %v462 = vpop.f32.mrf.mxu0
    %v463 = vadd.f32 0.0, %v462
    %v464 = vpop.f32.mrf.mxu0
    %465 = vdwg.mxu0
    %v466 = vmul.f32 %v40, %v40
    %v468 = vrot.slane %v466, 1
    %v470 = vadd.f32 %v466, %v468
    %v472 = vrot.slane %v470, 4
    %v474 = vmul.f32 %v40, %v472
    %v475 = vmul.f32 %v40, 9.81
    %v477 = vrot.slane %v475, 5
    %v479 = vadd.f32 %v474, %v477
    %v480 = vrot.slane %v470, 6
    %v482 = vsub.f32 %v479, %v480
    %v483 = vlaneseq
    %v484 = vshrl.u32 %v483, 7
    %v485 = vadd.s32 %v484, 8
    %vm486 = vcmp.eq.s32.totalorder %v484, 4
    %vm487 = vcmp.eq.s32.totalorder %v485, 4
    %v488 = vlaneseq
    %v489 = vshrl.u32 %v488, 7
    %v490 = vsub.s32 4, %v489
    %v491 = vrot.slane %v482, %v490
    %v492 = vsel %vm486, %v491, %v458
    %v493 = vsel %vm487, %v491, %v463
    %494 = vst [vmem:[#allocation7] sm:$0xff] %v492
    %495 = vst [vmem:[#allocation7 + $0x8] sm:$0xff] %v493
    // Predicated region
    $region18: #{tpu_custom_call.1} parent=1 // pred_check
      _
    $region19: #{tpu_custom_call.1} parent=1 // pred_check_branch
      %497 = sbr.rel (0) target = $region21
    $region20: #{tpu_custom_call.1} parent=1 // pred_region
      %s499 = ssub.s32 256, 256
      %500 = vsyncadd [#allocation4], %s499
      %s501 = sshll.u32 [#allocation7], 4
      %s502 = int_to_ptr.vmem [resolvable:$true] %s501
      %507 = dma.vmem_to_hbm [thread:$0]  %s502, 256, %s2, [#allocation4], 128, 128, 8
    $region21: #{tpu_custom_call.1} parent=1 // pred_fallthru
      _
    // Predicated region
    $region22: #{tpu_custom_call.1} parent=1 // pred_check
      _
    $region23: #{tpu_custom_call.1} parent=1 // pred_check_branch
      %509 = sbr.rel (0) target = $region25
    $region24: #{tpu_custom_call.1} parent=1 // pred_region
      %510 = dma.done [#allocation4], 256
    $region25: #{tpu_custom_call.1} parent=1 // pred_fallthru
      _
    %511 = vsyncpa [#allocation3], 1
    %512 = vsyncpa [#allocation6], 1
    %513 = vsyncpa [#allocation4], 1

</llo_original>
